<compile_context>
chip_gen: v7x
topology: tpu7x:2x2x1
jax: 0.10.0
libtpu: 0.0.40
codegen_flags: <defaults>
</compile_context>

<pallas_src>
import functools

import jax
import jax.numpy as jnp
from jax.experimental import pallas as pl
from jax.experimental.pallas import tpu as pltpu


def _round_up(x, m):
    return (x + m - 1) // m * m


def _vmem_budget_bytes():
    """Per-kernel VMEM buffer budget, derived from the device when available."""
    try:
        if jax.devices()[0].platform == "tpu":
            phys = int(pltpu.get_tpu_info().vmem_capacity_bytes)
            # ~112 MiB on v5e/v6e (128 MiB VMEM), ~48 MiB on v7x (64 MiB VMEM).
            return max(32 << 20, min(96 << 20, phys - (16 << 20)))
    except Exception:  # noqa: BLE001 - any failure -> conservative default
        pass
    return 48 << 20  # safe on every generation (and in interpret mode)


def _fused_kernel(seed_ref, x_ref, w_ref, g_ref, b_ref, o_ref,
                  sum_ref, sumsq_ref, scale_ref, shift_ref, *opt_scratch,
                  tl, inv_n, inv_keep, keep_thresh, apply_dropout, eps, use_y_cache):
    phase = pl.program_id(0)     # 0: conv + stats pass, 1: normalize/store pass
    t = pl.program_id(1)         # tile index along the N*L lane axis
    y_cache_ref = opt_scratch[0] if use_y_cache else None

    @pl.when(phase == 0)
    def _conv_and_stats():
        # Conv1d as a single MXU matmul over the im2col'd tile:
        # (H, C*K) @ (C*K, TL) -> (H, TL), bf16 inputs, f32 accumulation.
        y = jnp.dot(w_ref[...], x_ref[...], preferred_element_type=jnp.float32)

        @pl.when(t == 0)
        def _init():
            sum_ref[...] = jnp.zeros_like(sum_ref)
            sumsq_ref[...] = jnp.zeros_like(sumsq_ref)
            # Output block (0, 0) stays resident through phase 0; initialise it once so
            # an early writeback can never flush stale VMEM contents.
            o_ref[...] = jnp.zeros_like(o_ref)

        sum_ref[...] += jnp.sum(y, axis=1, keepdims=True)
        sumsq_ref[...] += jnp.sum(y * y, axis=1, keepdims=True)
        if use_y_cache:
            y_cache_ref[:, pl.ds(t * tl, tl)] = y

    @pl.when(phase == 1)
    def _normalize_store():
        @pl.when(t == 0)
        def _finalize_stats():
            mean = sum_ref[...] * inv_n                                  # (H, 1)
            var = jnp.maximum(sumsq_ref[...] * inv_n - mean * mean, 0.0)  # biased var
            rstd = jax.lax.rsqrt(var + eps)
            s = g_ref[...] * rstd * inv_keep          # fold BN affine + 1/(1-p)
            scale_ref[...] = s
            shift_ref[...] = b_ref[...] * inv_keep - mean * s

        if use_y_cache:
            y = y_cache_ref[:, pl.ds(t * tl, tl)]     # no x DMA / no matmul in phase 1
        else:
            y = jnp.dot(w_ref[...], x_ref[...], preferred_element_type=jnp.float32)

        # ReLU commutes with the positive 1/(1-p) factor, so one FMA + max covers
        # BN-normalize, BN-affine, ReLU and the dropout scale.
        z = jnp.maximum(y * scale_ref[...] + shift_ref[...], 0.0)

        if apply_dropout:
            # Counter-based hash PRNG (murmur3-style finalizer) on
            # (seed, channel, global column): pure uint32 elementwise ops, no
            # TPU-only PRNG primitives, no HBM-streamed mask.
            col = jax.lax.broadcasted_iota(jnp.int32, z.shape, 1) + t * tl
            row = jax.lax.broadcasted_iota(jnp.int32, z.shape, 0)
            h = (col.astype(jnp.uint32) * jnp.uint32(0x9E3779B1)
                 + row.astype(jnp.uint32) * jnp.uint32(0x85EBCA77)
                 + seed_ref[0].astype(jnp.uint32))
            h = h ^ (h >> 16)
            h = h * jnp.uint32(0x85EBCA6B)
            h = h ^ (h >> 13)
            h = h * jnp.uint32(0xC2B2AE35)
            h = h ^ (h >> 16)
            keep = h < jnp.uint32(keep_thresh)        # unsigned 32-bit threshold
            z = jnp.where(keep, z, 0.0)

        o_ref[...] = z.astype(o_ref.dtype)


def conv1d_bn_relu_dropout(x, weight, bias, gamma, beta, *, seed=0,
                           drop_p=0.2, eps=1e-5, lane_tile=8192,
                           compute_dtype=jnp.bfloat16,
                           vmem_budget_bytes=None, use_y_cache=None,
                           channel_major_output=False):
    """Fused Conv1d('same', reflect) + BatchNorm1d(batch stats) + ReLU + Dropout.

    x: (N, C_in, L); weight: (H, C_in, K); returns (N, H, L) (or (H, N, L) when
    channel_major_output=True, skipping the final transpose for chained layers).
    `bias` is accepted for API parity with nn.Conv1d but unused: BatchNorm with batch
    statistics subtracts the per-channel mean right after the conv, which cancels any
    conv bias exactly, so the output is unchanged.
    """
    del bias
    N, C, L = x.shape
    H, _, K = weight.shape
    pad_l = (K - 1) // 2
    pad_r = K - 1 - pad_l

    # ---- im2col in the wrapper (layout plumbing only) ------------------------------
    # TODO(synk): unfold inside the kernel from halo'd raw-x tiles to avoid this K-x
    #             amplified HBM materialization.
    x_pad = jnp.pad(x, ((0, 0), (0, 0), (pad_l, pad_r)), mode="reflect")  # (N,C,L+K-1)
    taps = jnp.stack([x_pad[:, :, k:k + L] for k in range(K)], axis=2)    # (N,C,K,L)
    x_col = taps.transpose(1, 2, 0, 3).reshape(C * K, N * L)              # (C*K, N*L)
    x_col = x_col.astype(compute_dtype)
    w2 = weight.reshape(H, C * K).astype(compute_dtype)

    CK = C * K
    NL = N * L
    out_dtype = x.dtype
    in_bytes = jnp.dtype(compute_dtype).itemsize
    out_bytes = jnp.dtype(out_dtype).itemsize

    # ---- tile / VMEM sizing ---------------------------------------------------------
    budget = _vmem_budget_bytes() if vmem_budget_bytes is None else int(vmem_budget_bytes)
    per_col = 2 * CK * in_bytes + 2 * H * out_bytes     # double-buffered x + out tiles
    lane_tile = max(128, (int(lane_tile) // 128) * 128)
    while lane_tile > 128 and lane_tile * per_col > budget // 2:
        lane_tile //= 2

    if NL <= lane_tile:
        tl = nl_pad = _round_up(NL, 128)
    else:
        tl = lane_tile
        nl_pad = _round_up(NL, tl)
    num_tiles = nl_pad // tl
    if nl_pad != NL:
        # Zero-padded columns give conv == 0, so they add nothing to sum / sumsq;
        # they are sliced off the output below.
        x_col = jnp.pad(x_col, ((0, 0), (0, nl_pad - NL)))

    tile_bytes = tl * per_col + H * CK * in_bytes + 4 * H * 4 + 4096
    y_cache_bytes = H * nl_pad * 4
    if use_y_cache is None:
        use_y_cache = (tile_bytes + y_cache_bytes) <= budget
    vmem_limit = int(tile_bytes + (y_cache_bytes if use_y_cache else 0) + (4 << 20))

    keep_prob = 1.0 - drop_p
    kernel = functools.partial(
        _fused_kernel,
        tl=tl,
        inv_n=1.0 / float(NL),
        inv_keep=1.0 / keep_prob,
        keep_thresh=min(int(keep_prob * (1 << 32)), (1 << 32) - 1),
        apply_dropout=drop_p > 0.0,
        eps=float(eps),
        use_y_cache=use_y_cache,
    )

    if use_y_cache:
        # Pin the x block index during phase 1 (conv is read from the VMEM y-cache).
        x_index_map = lambda p, t: (0, t * (1 - p))
    else:
        x_index_map = lambda p, t: (0, t)

    scratch = [
        pltpu.VMEM((H, 1), jnp.float32),   # per-channel sum
        pltpu.VMEM((H, 1), jnp.float32),   # per-channel sum of squares
        pltpu.VMEM((H, 1), jnp.float32),   # fused scale
        pltpu.VMEM((H, 1), jnp.float32),   # fused shift
    ]
    if use_y_cache:
        scratch.append(pltpu.VMEM((H, nl_pad), jnp.float32))   # conv-result cache

    out_col = pl.pallas_call(
        kernel,
        out_shape=jax.ShapeDtypeStruct((H, nl_pad), out_dtype),
        grid=(2, num_tiles),                 # (phase, N*L tile)
        in_specs=[
            pl.BlockSpec(memory_space=pltpu.MemorySpace.SMEM),    # seed (scalar)
            pl.BlockSpec((CK, tl), x_index_map),                  # x_col tile (bf16)
            pl.BlockSpec((H, CK), lambda p, t: (0, 0)),           # weights (bf16)
            pl.BlockSpec((H, 1), lambda p, t: (0, 0)),            # gamma
            pl.BlockSpec((H, 1), lambda p, t: (0, 0)),            # beta
        ],
        # Block (0,0) stays resident (and zero-initialised) through phase 0; phase 1
        # writes every output block exactly once.
        out_specs=pl.BlockSpec((H, tl), lambda p, t: (0, t * p)),
        scratch_shapes=scratch,
        compiler_params=pltpu.CompilerParams(
            # Both axes feed shared VMEM state (stats scratch / y-cache), so both stay
            # 'arbitrary'.  TODO(synk): v7x two-TensorCore split (see header).
            dimension_semantics=("arbitrary", "arbitrary"),
            vmem_limit_bytes=vmem_limit,
        ),
    )(jnp.asarray([seed], dtype=jnp.int32),
      x_col,
      w2,
      gamma.reshape(H, 1).astype(jnp.float32),
      beta.reshape(H, 1).astype(jnp.float32))

    out_col = out_col[:, :NL].reshape(H, N, L)
    if channel_major_output:
        return out_col                              # (H, N, L): skip the transpose
    return jnp.transpose(out_col, (1, 0, 2))        # (N, H, L)


if __name__ == "__main__":
    N, C_in, L, H, K = 2, 4, 16, 8, 5
    drop_p = 0.2

    key = jax.random.PRNGKey(0)
    k_w, k_x = jax.random.split(key, 2)

    # nn.init.xavier_uniform_(conv.weight): bound = sqrt(6 / (fan_in + fan_out))
    fan_in, fan_out = C_in * K, H * K
    bound = (6.0 / (fan_in + fan_out)) ** 0.5
    weight = jax.random.uniform(k_w, (H, C_in, K), jnp.float32, -bound, bound)
    bias = jnp.zeros((H,), jnp.float32)          # nn.init.zeros_(conv.bias)
    gamma = jnp.ones((H,), jnp.float32)          # batch_norm.weight = 1
    beta = jnp.zeros((H,), jnp.float32)          # batch_norm.bias = 0
    x = jax.random.normal(k_x, (N, C_in, L), jnp.float32)

    # Pure-JAX reference for the pre-dropout pipeline (PyTorch training-mode forward).
    # Inputs are rounded through bf16 to match the kernel's bf16 DMA/MXU path; all
    # accumulation and BN math stays f32 in both.
    xq = x.astype(jnp.bfloat16).astype(jnp.float32)
    wq = weight.astype(jnp.bfloat16).astype(jnp.float32)
    x_pad = jnp.pad(xq, ((0, 0), (0, 0), (2, 2)), mode="reflect")
    conv = jax.lax.conv_general_dilated(
        x_pad, wq, window_strides=(1,), padding="VALID",
        dimension_numbers=("NCH", "OIH", "NCH"))
    conv = conv + bias[None, :, None]
    mean = conv.mean(axis=(0, 2), keepdims=True)
    var = jnp.square(conv - mean).mean(axis=(0, 2), keepdims=True)
    ref_pre = (conv - mean) / jnp.sqrt(var + 1e-5)
    ref_pre = jnp.maximum(ref_pre * gamma[None, :, None] + beta[None, :, None], 0.0)

    # 1) drop_p = 0, default (y-cache) path must match the reference.
    out0 = conv1d_bn_relu_dropout(x, weight, bias, gamma, beta, seed=0, drop_p=0.0)
    out0 = jax.block_until_ready(out0)
    assert out0.shape == (N, H, L)
    assert jnp.allclose(out0, ref_pre, atol=1e-3, rtol=1e-3), \
        float(jnp.max(jnp.abs(out0 - ref_pre)))

    # 2) drop_p = 0, recompute-fallback path (y-cache disabled) must also match.
    out1 = conv1d_bn_relu_dropout(x, weight, bias, gamma, beta, seed=0, drop_p=0.0,
                                  use_y_cache=False)
    out1 = jax.block_until_ready(out1)
    assert jnp.allclose(out1, ref_pre, atol=1e-3, rtol=1e-3), \
        float(jnp.max(jnp.abs(out1 - ref_pre)))

    # 3) drop_p = 0.2: every element must be 0 (dropped) or ref/(1-p) (kept), and the
    #    keep-rate among active (post-ReLU nonzero) elements must be ~0.8.
    out = conv1d_bn_relu_dropout(x, weight, bias, gamma, beta, seed=0, drop_p=drop_p)
    out = jax.block_until_ready(out)
    assert out.shape == (N, H, L)
    ref_scaled = ref_pre / (1.0 - drop_p)
    err = jnp.minimum(jnp.abs(out), jnp.abs(out - ref_scaled))
    assert float(jnp.max(err)) < 1e-3, float(jnp.max(err))
    active = ref_scaled > 1e-2
    n_active = float(jnp.maximum(jnp.sum(active), 1))
    keep_rate = float(jnp.sum((out > 1e-3) & active)) / n_active
    assert 0.45 < keep_rate < 0.99, keep_rate

    print("KERNEL_OK")
</pallas_src>

<mosaic_0001>
module attributes {stable_mosaic.version = 11 : i64} {
  func.func @_fused_kernel(%arg0: i32, %arg1: i32, %arg2: memref<1xi32, #tpu.memory_space<smem>>, %arg3: memref<20x128xbf16, #tpu.memory_space<vmem>>, %arg4: memref<8x20xbf16, #tpu.memory_space<vmem>>, %arg5: memref<8x1xf32, #tpu.memory_space<vmem>>, %arg6: memref<8x1xf32, #tpu.memory_space<vmem>>, %arg7: memref<8x128xf32, #tpu.memory_space<vmem>>, %arg8: memref<8x1xf32, #tpu.memory_space<vmem>>, %arg9: memref<8x1xf32, #tpu.memory_space<vmem>>, %arg10: memref<8x1xf32, #tpu.memory_space<vmem>>, %arg11: memref<8x1xf32, #tpu.memory_space<vmem>>, %arg12: memref<8x128xf32, #tpu.memory_space<vmem>>) attributes {dimension_semantics = [#tpu.dimension_semantics<arbitrary>, #tpu.dimension_semantics<arbitrary>], iteration_bounds = array<i64: 2, 1>, scalar_prefetch = 0 : i64, scratch_operands = 5 : i64, tpu.core_type = #tpu.core_type<tc>, window_params = [{transform_indices = @transform_0, window_bounds = array<i64: 1>}, {transform_indices = @transform_1, window_bounds = array<i64: 20, 128>}, {pipeline_mode = #tpu.pipeline_mode<synchronous>, transform_indices = @transform_2, window_bounds = array<i64: 8, 20>}, {pipeline_mode = #tpu.pipeline_mode<synchronous>, transform_indices = @transform_3, window_bounds = array<i64: 8, 1>}, {pipeline_mode = #tpu.pipeline_mode<synchronous>, transform_indices = @transform_4, window_bounds = array<i64: 8, 1>}, {transform_indices = @transform_5, window_bounds = array<i64: 8, 128>}]} {
    %c0_i32 = arith.constant 0 : i32
    %0 = arith.cmpi eq, %arg0, %c0_i32 : i32
    %1 = arith.extui %0 : i1 to i32
    %c0_i32_0 = arith.constant 0 : i32
    %2 = arith.cmpi ne, %1, %c0_i32_0 : i32
    scf.if %2 {
      %c0 = arith.constant 0 : index
      %c0_2 = arith.constant 0 : index
      %6 = vector.load %arg4[%c0, %c0_2] : memref<8x20xbf16, #tpu.memory_space<vmem>>, vector<8x20xbf16>
      %c0_3 = arith.constant 0 : index
      %c0_4 = arith.constant 0 : index
      %7 = vector.load %arg3[%c0_3, %c0_4] : memref<20x128xbf16, #tpu.memory_space<vmem>>, vector<20x128xbf16>
      %cst = arith.constant dense<0.000000e+00> : vector<8x128xf32>
      %8 = tpu.matmul %6, %7, %cst {dimension_numbers = #tpu.dot_dimension_numbers<[1], [0], [0], [1], [0, 0, 1, 1], [], []>} : vector<8x20xbf16>, vector<20x128xbf16>, vector<8x128xf32> -> vector<8x128xf32>
      %c0_i32_5 = arith.constant 0 : i32
      %9 = arith.cmpi eq, %arg1, %c0_i32_5 : i32
      %10 = arith.extui %9 : i1 to i32
      %c0_i32_6 = arith.constant 0 : i32
      %11 = arith.cmpi ne, %10, %c0_i32_6 : i32
      scf.if %11 {
        %cst_18 = arith.constant 0.000000e+00 : f32
        %26 = vector.broadcast %cst_18 : f32 to vector<8x1xf32>
        %c0_19 = arith.constant 0 : index
        %c0_20 = arith.constant 0 : index
        %27 = vector.load %arg8[%c0_19, %c0_20] : memref<8x1xf32, #tpu.memory_space<vmem>>, vector<8x1xf32>
        tpu.vector_store %arg8[%c0_19, %c0_20], %26 {strides = array<i32>} : memref<8x1xf32, #tpu.memory_space<vmem>>, vector<8x1xf32>,
        %cst_21 = arith.constant 0.000000e+00 : f32
        %28 = vector.broadcast %cst_21 : f32 to vector<8x1xf32>
        %c0_22 = arith.constant 0 : index
        %c0_23 = arith.constant 0 : index
        %29 = vector.load %arg9[%c0_22, %c0_23] : memref<8x1xf32, #tpu.memory_space<vmem>>, vector<8x1xf32>
        tpu.vector_store %arg9[%c0_22, %c0_23], %28 {strides = array<i32>} : memref<8x1xf32, #tpu.memory_space<vmem>>, vector<8x1xf32>,
        %cst_24 = arith.constant 0.000000e+00 : f32
        %30 = vector.broadcast %cst_24 : f32 to vector<8x128xf32>
        %c0_25 = arith.constant 0 : index
        %c0_26 = arith.constant 0 : index
        %31 = vector.load %arg7[%c0_25, %c0_26] : memref<8x128xf32, #tpu.memory_space<vmem>>, vector<8x128xf32>
        tpu.vector_store %arg7[%c0_25, %c0_26], %30 {strides = array<i32>} : memref<8x128xf32, #tpu.memory_space<vmem>>, vector<8x128xf32>,
      } else {
      }
      %c0_7 = arith.constant 0 : index
      %c0_8 = arith.constant 0 : index
      %12 = vector.load %arg8[%c0_7, %c0_8] : memref<8x1xf32, #tpu.memory_space<vmem>>, vector<8x1xf32>
      %cst_9 = arith.constant dense<0.000000e+00> : vector<8xf32>
      %13 = vector.multi_reduction <add>, %8, %cst_9 [1] : vector<8x128xf32> to vector<8xf32>
      %14 = vector.shape_cast %13 : vector<8xf32> to vector<8x1xf32>
      %15 = arith.addf %12, %14 : vector<8x1xf32>
      %c0_10 = arith.constant 0 : index
      %c0_11 = arith.constant 0 : index
      %16 = vector.load %arg8[%c0_10, %c0_11] : memref<8x1xf32, #tpu.memory_space<vmem>>, vector<8x1xf32>
      tpu.vector_store %arg8[%c0_10, %c0_11], %15 {strides = array<i32>} : memref<8x1xf32, #tpu.memory_space<vmem>>, vector<8x1xf32>,
      %c0_12 = arith.constant 0 : index
      %c0_13 = arith.constant 0 : index
      %17 = vector.load %arg9[%c0_12, %c0_13] : memref<8x1xf32, #tpu.memory_space<vmem>>, vector<8x1xf32>
      %18 = arith.mulf %8, %8 : vector<8x128xf32>
      %cst_14 = arith.constant dense<0.000000e+00> : vector<8xf32>
      %19 = vector.multi_reduction <add>, %18, %cst_14 [1] : vector<8x128xf32> to vector<8xf32>
      %20 = vector.shape_cast %19 : vector<8xf32> to vector<8x1xf32>
      %21 = arith.addf %17, %20 : vector<8x1xf32>
      %c0_15 = arith.constant 0 : index
      %c0_16 = arith.constant 0 : index
      %22 = vector.load %arg9[%c0_15, %c0_16] : memref<8x1xf32, #tpu.memory_space<vmem>>, vector<8x1xf32>
      tpu.vector_store %arg9[%c0_15, %c0_16], %21 {strides = array<i32>} : memref<8x1xf32, #tpu.memory_space<vmem>>, vector<8x1xf32>,
      %c128_i32 = arith.constant 128 : i32
      %23 = arith.muli %arg1, %c128_i32 : i32
      %c0_17 = arith.constant 0 : index
      %24 = arith.index_cast %23 : i32 to index
      %25 = vector.load %arg12[%c0_17, %24] : memref<8x128xf32, #tpu.memory_space<vmem>>, vector<8x128xf32>
      tpu.vector_store %arg12[%c0_17, %24], %8 {strides = array<i32>} : memref<8x128xf32, #tpu.memory_space<vmem>>, vector<8x128xf32>,
    } else {
    }
    %c1_i32 = arith.constant 1 : i32
    %3 = arith.cmpi eq, %arg0, %c1_i32 : i32
    %4 = arith.extui %3 : i1 to i32
    %c0_i32_1 = arith.constant 0 : i32
    %5 = arith.cmpi ne, %4, %c0_i32_1 : i32
    scf.if %5 {
      %c0_i32_2 = arith.constant 0 : i32
      %6 = arith.cmpi eq, %arg1, %c0_i32_2 : i32
      %7 = arith.extui %6 : i1 to i32
      %c0_i32_3 = arith.constant 0 : i32
      %8 = arith.cmpi ne, %7, %c0_i32_3 : i32
      scf.if %8 {
        %c0_10 = arith.constant 0 : index
        %c0_11 = arith.constant 0 : index
        %21 = vector.load %arg8[%c0_10, %c0_11] : memref<8x1xf32, #tpu.memory_space<vmem>>, vector<8x1xf32>
        %cst_12 = arith.constant 3.125000e-02 : f32
        %22 = vector.broadcast %cst_12 : f32 to vector<8x1xf32>
        %23 = arith.mulf %21, %22 : vector<8x1xf32>
        %c0_13 = arith.constant 0 : index
        %c0_14 = arith.constant 0 : index
        %24 = vector.load %arg9[%c0_13, %c0_14] : memref<8x1xf32, #tpu.memory_space<vmem>>, vector<8x1xf32>
        %cst_15 = arith.constant 3.125000e-02 : f32
        %25 = vector.broadcast %cst_15 : f32 to vector<8x1xf32>
        %26 = arith.mulf %24, %25 : vector<8x1xf32>
        %27 = arith.mulf %23, %23 : vector<8x1xf32>
        %28 = arith.subf %26, %27 : vector<8x1xf32>
        %cst_16 = arith.constant 0.000000e+00 : f32
        %29 = vector.broadcast %cst_16 : f32 to vector<8x1xf32>
        %30 = arith.maximumf %28, %29 : vector<8x1xf32>
        %cst_17 = arith.constant 9.99999974E-6 : f32
        %31 = vector.broadcast %cst_17 : f32 to vector<8x1xf32>
        %32 = arith.addf %30, %31 : vector<8x1xf32>
        %33 = math.rsqrt %32 : vector<8x1xf32>
        %c0_18 = arith.constant 0 : index
        %c0_19 = arith.constant 0 : index
        %34 = vector.load %arg5[%c0_18, %c0_19] : memref<8x1xf32, #tpu.memory_space<vmem>>, vector<8x1xf32>
        %35 = arith.mulf %34, %33 : vector<8x1xf32>
        %cst_20 = arith.constant 1.000000e+00 : f32
        %36 = vector.broadcast %cst_20 : f32 to vector<8x1xf32>
        %37 = arith.mulf %35, %36 : vector<8x1xf32>
        %c0_21 = arith.constant 0 : index
        %c0_22 = arith.constant 0 : index
        %38 = vector.load %arg10[%c0_21, %c0_22] : memref<8x1xf32, #tpu.memory_space<vmem>>, vector<8x1xf32>
        tpu.vector_store %arg10[%c0_21, %c0_22], %37 {strides = array<i32>} : memref<8x1xf32, #tpu.memory_space<vmem>>, vector<8x1xf32>,
        %c0_23 = arith.constant 0 : index
        %c0_24 = arith.constant 0 : index
        %39 = vector.load %arg6[%c0_23, %c0_24] : memref<8x1xf32, #tpu.memory_space<vmem>>, vector<8x1xf32>
        %cst_25 = arith.constant 1.000000e+00 : f32
        %40 = vector.broadcast %cst_25 : f32 to vector<8x1xf32>
        %41 = arith.mulf %39, %40 : vector<8x1xf32>
        %42 = arith.mulf %23, %37 : vector<8x1xf32>
        %43 = arith.subf %41, %42 : vector<8x1xf32>
        %c0_26 = arith.constant 0 : index
        %c0_27 = arith.constant 0 : index
        %44 = vector.load %arg11[%c0_26, %c0_27] : memref<8x1xf32, #tpu.memory_space<vmem>>, vector<8x1xf32>
        tpu.vector_store %arg11[%c0_26, %c0_27], %43 {strides = array<i32>} : memref<8x1xf32, #tpu.memory_space<vmem>>, vector<8x1xf32>,
      } else {
      }
      %c128_i32 = arith.constant 128 : i32
      %9 = arith.muli %arg1, %c128_i32 : i32
      %c0 = arith.constant 0 : index
      %10 = arith.index_cast %9 : i32 to index
      %11 = vector.load %arg12[%c0, %10] : memref<8x128xf32, #tpu.memory_space<vmem>>, vector<8x128xf32>
      %c0_4 = arith.constant 0 : index
      %c0_5 = arith.constant 0 : index
      %12 = vector.load %arg10[%c0_4, %c0_5] : memref<8x1xf32, #tpu.memory_space<vmem>>, vector<8x1xf32>
      %13 = vector.broadcast %12 : vector<8x1xf32> to vector<8x128xf32>
      %14 = arith.mulf %11, %13 : vector<8x128xf32>
      %c0_6 = arith.constant 0 : index
      %c0_7 = arith.constant 0 : index
      %15 = vector.load %arg11[%c0_6, %c0_7] : memref<8x1xf32, #tpu.memory_space<vmem>>, vector<8x1xf32>
      %16 = vector.broadcast %15 : vector<8x1xf32> to vector<8x128xf32>
      %17 = arith.addf %14, %16 : vector<8x128xf32>
      %cst = arith.constant 0.000000e+00 : f32
      %18 = vector.broadcast %cst : f32 to vector<8x128xf32>
      %19 = arith.maximumf %17, %18 : vector<8x128xf32>
      %c0_8 = arith.constant 0 : index
      %c0_9 = arith.constant 0 : index
      %20 = vector.load %arg7[%c0_8, %c0_9] : memref<8x128xf32, #tpu.memory_space<vmem>>, vector<8x128xf32>
      tpu.vector_store %arg7[%c0_8, %c0_9], %19 {strides = array<i32>} : memref<8x128xf32, #tpu.memory_space<vmem>>, vector<8x128xf32>,
    } else {
    }
    return
  }
  func.func @transform_0(%arg0: i32, %arg1: i32) -> i32 {
    %c0_i32 = arith.constant 0 : i32
    %c0_i32_0 = arith.constant 0 : i32
    return %c0_i32 : i32
  }
  func.func @transform_1(%arg0: i32, %arg1: i32) -> (i32, i32) {
    %c1_i32 = arith.constant 1 : i32
    %0 = arith.subi %c1_i32, %arg0 : i32
    %1 = arith.muli %arg1, %0 : i32
    %c0_i32 = arith.constant 0 : i32
    %c0_i32_0 = arith.constant 0 : i32
    return %c0_i32, %1 : i32, i32
  }
  func.func @transform_2(%arg0: i32, %arg1: i32) -> (i32, i32) {
    %c0_i32 = arith.constant 0 : i32
    %c0_i32_0 = arith.constant 0 : i32
    %c0_i32_1 = arith.constant 0 : i32
    return %c0_i32, %c0_i32_0 : i32, i32
  }
  func.func @transform_3(%arg0: i32, %arg1: i32) -> (i32, i32) {
    %c0_i32 = arith.constant 0 : i32
    %c0_i32_0 = arith.constant 0 : i32
    %c0_i32_1 = arith.constant 0 : i32
    return %c0_i32, %c0_i32_0 : i32, i32
  }
  func.func @transform_4(%arg0: i32, %arg1: i32) -> (i32, i32) {
    %c0_i32 = arith.constant 0 : i32
    %c0_i32_0 = arith.constant 0 : i32
    %c0_i32_1 = arith.constant 0 : i32
    return %c0_i32, %c0_i32_0 : i32, i32
  }
  func.func @transform_5(%arg0: i32, %arg1: i32) -> (i32, i32) {
    %0 = arith.muli %arg1, %arg0 : i32
    %c0_i32 = arith.constant 0 : i32
    %c0_i32_0 = arith.constant 0 : i32
    return %c0_i32, %0 : i32, i32
  }
}

</mosaic_0001>

<llo_original>
// kernel: tpu_custom_call.1
$region0: #{tpu_custom_call.1}
  #allocation0 [shape = 'u32[]', space=smem, size = 0x4, offset = 0x4, fixed_abs, tag = 'smem constant byte address 0x4 - core index']
  #allocation1 [shape = 'u32[144,128]{1,0:T(1,128)}', space=vmem, size = 0x12000, scoped, tag = 'internal scratch']
  #allocation2 [shape = 'f32[8,1]{1,0:T(8,128)}', space=vmem, size = 0x1000, scoped, tag = 'scratch operand']
  #allocation3 [shape = 'f32[8,1]{1,0:T(8,128)}', space=vmem, size = 0x1000, scoped, tag = 'scratch operand']
  #allocation4 [shape = 'f32[8,1]{1,0:T(8,128)}', space=vmem, size = 0x1000, scoped, tag = 'scratch operand']
  #allocation5 [shape = 'f32[8,1]{1,0:T(8,128)}', space=vmem, size = 0x1000, scoped, tag = 'scratch operand']
  #allocation6 [shape = 'f32[8,128]{1,0:T(8,128)}', space=vmem, size = 0x1000, scoped, tag = 'scratch operand']
  #allocation7 [shape = 's32[1]{0:T(128)S(6)}', space=smem, size = 0x200, scoped, tag = 'scoped memory for tpu_custom_call.1']
  %s0 = inlined_call_operand.<no memory space> [shape: s32[1], index: 0, kind: input, shape index: {}]
  %s1 = inlined_call_operand.vmem [shape: bf16[20,128], index: 1, kind: input, shape index: {}]
  %s2 = inlined_call_operand.vmem [shape: bf16[8,20], index: 2, kind: input, shape index: {}]
  %s3 = inlined_call_operand.vmem [shape: f32[8,1], index: 3, kind: input, shape index: {}]
  %s4 = inlined_call_operand.vmem [shape: f32[8,1], index: 4, kind: input, shape index: {}]
  %s5 = inlined_call_operand.hbm [shape: f32[8,128], index: 5, kind: output, shape index: {}]
  %s6 = sld [smem:[#allocation0]]
  $region69: #{tpu_custom_call.1} parent=0
    _
  %s8 = ssub.s32 1, %s6
  %s9 = scalar_select 0, %s8, %s6
  %10 = sst [smem:[#allocation7]] %s0
  $region1: #{tpu_custom_call.1} parent=0
    #allocation8 [shape = 'u8[8192]{0}', space=vmem, size = 0x2000, scoped, tag = 'output window, operand 0']
    #allocation9 [shape = 's32[2]{0}', space=sflag, size = 0x8, scoped, tag = 'scoped memory for tpu_custom_call.1']
    %11 = vsyncpa [#allocation9], 0
    %s12 = scalar_lea.sflag [#allocation9], 1
    %13 = vsyncpa %s12, 0
    loop: start=0, step=1, limit=4
    $region2: #{tpu_custom_call.1} parent=1 // loop_pre_header
      _
    $region3: #{tpu_custom_call.1} parent=1 // loop_header
      %s15 = sphi 0, %s19
      %p16 = scmp.ge.s32.totalorder %s15, 4
      %s22 = sphi 0, %s34
      %s23 = sphi 0, %s30
      %s24 = sphi 0, %s22
      %s25 = sphi 0, %s23
      %s26 = sphi 0, %s24
      %s27 = sphi 0, %s25
      %s35 = sphi 0, %s35
      %s37 = sphi 0, %s35
      %s38 = sphi 0, %s37
      %s52 = sphi 0, %s38
      %s62 = sphi 0, %s64
      %s65 = sphi 0, %s62
      %s66 = sphi 0, %s65
      %s82 = sphi 0, %s66
      %s86 = sphi 0, %s86
      %s88 = sphi 0, %s86
      %s89 = sphi 0, %s88
      %s103 = sphi 0, %s89
      %s107 = sphi 0, %s107
      %s109 = sphi 0, %s107
      %s110 = sphi 0, %s109
      %s124 = sphi 0, %s110
      %s128 = sphi 0, %s128
      %s130 = sphi 0, %s128
      %s131 = sphi 0, %s130
      %s145 = sphi 0, %s131
      %s153 = sphi 0, %s155
      %s156 = sphi 0, %s153
      %s157 = sphi 0, %s156
      %s173 = sphi 0, %s157
    $region4: #{tpu_custom_call.1} parent=1 // loop_header_branch
      %18 = sbr.rel (%p16) target = $region8
    $region5: #{tpu_custom_call.1} parent=1 // loop_body
      %s20 = ssub.s32 %s15, 1
      %s21 = ssub.s32 %s15, 2
      %s28 = sadd.s32 1, %s23
      %p29 = scmp.ge.s32.totalorder %s28, 1
      %s30 = scalar_select %p29, 0, %s28
      %s31 = sadd.s32 1, %s22
      %s32 = scalar_select %p29, %s31, %s22
      %p33 = scmp.ge.s32.totalorder %s32, 2
      %s34 = scalar_select %p33, 0, %s32
      %s36 = sadd.s32 %s35, 1
      %p39 = scmp.eq.s32.totalorder %s15, 1
      %p40 = scmp.ne.s32.totalorder %s35, %s37
      %p41 = scmp.eq.s32.totalorder %s15, 0
      %p42 = por %p40, %p41
      %p43 = scmp.ne.s32.totalorder %s35, %s37
      %p44 = scmp.eq.s32.totalorder %s20, 1
      %p45 = por %p43, %p44
      %p46 = scmp.ne.s32.totalorder %s37, %s38
      %p47 = scmp.eq.s32.totalorder %s20, 0
      %p48 = por %p46, %p47
      %p49 = scmp.ne.s32.totalorder %s37, %s38
      %p50 = scmp.eq.s32.totalorder %s21, 1
      %p51 = por %p49, %p50
      %p53 = scmp.ne.s32.totalorder %s38, %s52
      %p54 = scmp.eq.s32.totalorder %s21, 0
      %p55 = por %p53, %p54
      %s56 = ssub.s32 1, %s22
      %s57 = smul.u32 %s23, %s56
      %s58 = ssub.s32 1, %s34
      %s59 = smul.u32 %s30, %s58
      %s60 = ssub.s32 %s57, %s59
      %p61 = scmp.eq.s32.totalorder %s60, 0
      %s63 = sadd.s32 %s62, 1
      %s64 = scalar_select %p61, %s62, %s63
      %p67 = pneg %p61
      %p68 = scmp.eq.s32.totalorder %s15, 1
      %p69 = por %p67, %p68
      %p70 = scmp.ne.s32.totalorder %s62, %s65
      %p71 = scmp.eq.s32.totalorder %s15, 0
      %p72 = por %p70, %p71
      %p73 = scmp.ne.s32.totalorder %s62, %s65
      %p74 = scmp.eq.s32.totalorder %s20, 1
      %p75 = por %p73, %p74
      %p76 = scmp.ne.s32.totalorder %s65, %s66
      %p77 = scmp.eq.s32.totalorder %s20, 0
      %p78 = por %p76, %p77
      %p79 = scmp.ne.s32.totalorder %s65, %s66
      %p80 = scmp.eq.s32.totalorder %s21, 1
      %p81 = por %p79, %p80
      %p83 = scmp.ne.s32.totalorder %s66, %s82
      %p84 = scmp.eq.s32.totalorder %s21, 0
      %p85 = por %p83, %p84
      %s87 = sadd.s32 %s86, 1
      %p90 = scmp.eq.s32.totalorder %s15, 1
      %p91 = scmp.ne.s32.totalorder %s86, %s88
      %p92 = scmp.eq.s32.totalorder %s15, 0
      %p93 = por %p91, %p92
      %p94 = scmp.ne.s32.totalorder %s86, %s88
      %p95 = scmp.eq.s32.totalorder %s20, 1
      %p96 = por %p94, %p95
      %p97 = scmp.ne.s32.totalorder %s88, %s89
      %p98 = scmp.eq.s32.totalorder %s20, 0
      %p99 = por %p97, %p98
      %p100 = scmp.ne.s32.totalorder %s88, %s89
      %p101 = scmp.eq.s32.totalorder %s21, 1
      %p102 = por %p100, %p101
      %p104 = scmp.ne.s32.totalorder %s89, %s103
      %p105 = scmp.eq.s32.totalorder %s21, 0
      %p106 = por %p104, %p105
      %s108 = sadd.s32 %s107, 1
      %p111 = scmp.eq.s32.totalorder %s15, 1
      %p112 = scmp.ne.s32.totalorder %s107, %s109
      %p113 = scmp.eq.s32.totalorder %s15, 0
      %p114 = por %p112, %p113
      %p115 = scmp.ne.s32.totalorder %s107, %s109
      %p116 = scmp.eq.s32.totalorder %s20, 1
      %p117 = por %p115, %p116
      %p118 = scmp.ne.s32.totalorder %s109, %s110
      %p119 = scmp.eq.s32.totalorder %s20, 0
      %p120 = por %p118, %p119
      %p121 = scmp.ne.s32.totalorder %s109, %s110
      %p122 = scmp.eq.s32.totalorder %s21, 1
      %p123 = por %p121, %p122
      %p125 = scmp.ne.s32.totalorder %s110, %s124
      %p126 = scmp.eq.s32.totalorder %s21, 0
      %p127 = por %p125, %p126
      %s129 = sadd.s32 %s128, 1
      %p132 = scmp.eq.s32.totalorder %s15, 1
      %p133 = scmp.ne.s32.totalorder %s128, %s130
      %p134 = scmp.eq.s32.totalorder %s15, 0
      %p135 = por %p133, %p134
      %p136 = scmp.ne.s32.totalorder %s128, %s130
      %p137 = scmp.eq.s32.totalorder %s20, 1
      %p138 = por %p136, %p137
      %p139 = scmp.ne.s32.totalorder %s130, %s131
      %p140 = scmp.eq.s32.totalorder %s20, 0
      %p141 = por %p139, %p140
      %p142 = scmp.ne.s32.totalorder %s130, %s131
      %p143 = scmp.eq.s32.totalorder %s21, 1
      %p144 = por %p142, %p143
      %p146 = scmp.ne.s32.totalorder %s131, %s145
      %p147 = scmp.eq.s32.totalorder %s21, 0
      %p148 = por %p146, %p147
      %s149 = smul.u32 %s23, %s22
      %s150 = smul.u32 %s30, %s34
      %s151 = ssub.s32 %s149, %s150
      %p152 = scmp.eq.s32.totalorder %s151, 0
      %s154 = sadd.s32 %s153, 1
      %s155 = scalar_select %p152, %s153, %s154
      %p158 = pneg %p152
      %p159 = scmp.eq.s32.totalorder %s15, 1
      %p160 = por %p158, %p159
      %p161 = scmp.ne.s32.totalorder %s153, %s156
      %p162 = scmp.eq.s32.totalorder %s15, 0
      %p163 = por %p161, %p162
      %p164 = scmp.ne.s32.totalorder %s153, %s156
      %p165 = scmp.eq.s32.totalorder %s20, 1
      %p166 = por %p164, %p165
      %p167 = scmp.ne.s32.totalorder %s156, %s157
      %p168 = scmp.eq.s32.totalorder %s20, 0
      %p169 = por %p167, %p168
      %p170 = scmp.ne.s32.totalorder %s156, %s157
      %p171 = scmp.eq.s32.totalorder %s21, 1
      %p172 = por %p170, %p171
      %p174 = scmp.ne.s32.totalorder %s157, %s173
      %p175 = scmp.eq.s32.totalorder %s21, 0
      %p176 = por %p174, %p175
      %p177 = scmp.le.s32.totalorder 1, %s15
      %p178 = scmp.lt.s32.totalorder %s15, 3
      %p179 = pnand %p177, %p178
      %p180 = pneg %p179
      // Predicated region
      $region9: #{tpu_custom_call.1} parent=5 // pred_check
        _
      $region10: #{tpu_custom_call.1} parent=5 // pred_check_branch
        %182 = sbr.rel (%p179) target = $region12
      $region11: #{tpu_custom_call.1} parent=5 // pred_region
        %s183 = ssub.s32 %s15, 1
        // Predicated region
        $region13: #{tpu_custom_call.1} parent=11 // pred_check
          %p184 = pneg %p48
        $region14: #{tpu_custom_call.1} parent=11 // pred_check_branch
          %186 = sbr.rel (%p184) target = $region16
        $region15: #{tpu_custom_call.1} parent=11 // pred_region
          _
        $region16: #{tpu_custom_call.1} parent=11 // pred_fallthru
          _
        // Predicated region
        $region17: #{tpu_custom_call.1} parent=11 // pred_check
          %p187 = pneg %p99
        $region18: #{tpu_custom_call.1} parent=11 // pred_check_branch
          %189 = sbr.rel (%p187) target = $region20
        $region19: #{tpu_custom_call.1} parent=11 // pred_region
          _
        $region20: #{tpu_custom_call.1} parent=11 // pred_fallthru
          _
        // Predicated region
        $region21: #{tpu_custom_call.1} parent=11 // pred_check
          %p190 = pneg %p120
        $region22: #{tpu_custom_call.1} parent=11 // pred_check_branch
          %192 = sbr.rel (%p190) target = $region24
        $region23: #{tpu_custom_call.1} parent=11 // pred_region
          _
        $region24: #{tpu_custom_call.1} parent=11 // pred_fallthru
          _
        // Predicated region
        $region25: #{tpu_custom_call.1} parent=11 // pred_check
          %p193 = pneg %p141
        $region26: #{tpu_custom_call.1} parent=11 // pred_check_branch
          %195 = sbr.rel (%p193) target = $region28
        $region27: #{tpu_custom_call.1} parent=11 // pred_region
          _
        $region28: #{tpu_custom_call.1} parent=11 // pred_fallthru
          _
      $region12: #{tpu_custom_call.1} parent=5 // pred_fallthru
        _
      %p196 = scmp.lt.s32.totalorder %s15, 2
      // Predicated region
      $region29: #{tpu_custom_call.1} parent=5 // pred_check
        %p197 = pneg %p196
      $region30: #{tpu_custom_call.1} parent=5 // pred_check_branch
        %199 = sbr.rel (%p197) target = $region32
      $region31: #{tpu_custom_call.1} parent=5 // pred_region
        // Predicated region
        $region33: #{tpu_custom_call.1} parent=31 // pred_check
          %p200 = pneg %p72
        $region34: #{tpu_custom_call.1} parent=31 // pred_check_branch
          %202 = sbr.rel (%p200) target = $region36
        $region35: #{tpu_custom_call.1} parent=31 // pred_region
          %s203 = ssub.s32 1, %s22
          %s204 = smul.u32 %s23, %s203
          %p205 = scmp.lt.s32.totalorder %s204, 0
          %s206 = scalar_select %p205, %s204, 0
          %s207 = smul.addr %s206, 4
          %s208 = scalar_lea.vmem %s1, %s207
          %s209 = ssub.s32 1, %s22
          %s210 = smul.u32 %s23, %s209
        $region36: #{tpu_custom_call.1} parent=31 // pred_fallthru
          _
      $region32: #{tpu_custom_call.1} parent=5 // pred_fallthru
        _
      %p211 = scmp.le.s32.totalorder 1, %s15
      %p212 = scmp.lt.s32.totalorder %s15, 3
      %p213 = pnand %p211, %p212
      %p214 = pneg %p213
      // Predicated region
      $region37: #{tpu_custom_call.1} parent=5 // pred_check
        _
      $region38: #{tpu_custom_call.1} parent=5 // pred_check_branch
        %216 = sbr.rel (%p213) target = $region40
      $region39: #{tpu_custom_call.1} parent=5 // pred_region
        %s217 = ssub.s32 %s15, 1
        %p218 = pneg %p48
        %p219 = pneg %p45
        %s220 = ssub.s32 1, %s24
        %s221 = smul.u32 %s25, %s220
        %p222 = scmp.lt.s32.totalorder %s221, 0
        %s223 = scalar_select %p222, %s221, 0
        %s224 = smul.addr %s223, 4
        %s225 = scalar_lea.vmem %s1, %s224
        %p226 = pneg %p78
        %p227 = pneg %p75
        %p228 = pneg %p99
        %p229 = pneg %p96
        %p230 = pneg %p120
        %p231 = pneg %p117
        %p232 = pneg %p141
        %p233 = pneg %p138
        %p234 = pneg %p169
        %p235 = pneg %p166
        %s236 = sand.u32 %s156, 1
        %s237 = scalar_lea.sflag [#allocation9], %s236
        %s238 = sand.u32 %s156, 1
        %s239 = smul.addr %s238, 8
        %s240 = scalar_lea.vmem [#allocation8], %s239
        %s241 = ssub.s32 1, %s24
        %s242 = smul.u32 %s25, %s241
        %p243 = scmp.lt.s32.totalorder %s242, 0
        %s244 = scalar_select %p243, %s242, 0
        %s245 = smul.addr %s244, 4
        %s246 = scalar_lea.vmem %s1, %s245
        %s247 = ssub.s32 1, %s24
        %s248 = smul.u32 %s25, %s247
        %s249 = smul.u32 %s25, %s24
        %p251 = scmp.eq.s32.totalorder %s24, 0
        // Predicated region
        $region41: #{tpu_custom_call.1} parent=39 // pred_check
          %p252 = pneg %p251
        $region42: #{tpu_custom_call.1} parent=39 // pred_check_branch
          %254 = sbr.rel (%p252) target = $region44
        $region43: #{tpu_custom_call.1} parent=39 // pred_region
          %v255 = vld [vmem:[%s2] sm:$0xf]
          %v256 = vld [vmem:[%s246] sm:$0xf]
          %v257 = vld [vmem:[%s246 + $0x4] sm:$0xf]
          %v258 = vld [vmem:[%s246 + $0x8] sm:$0x3]
          %v262 = vunpack.c.l.b16 %v256
          %v263 = vunpack.c.l.b16 %v257
          %v264 = vunpack.c.l.b16 %v258
          %v265 = vpack.c.b16 %v263, %v262
          %v266 = vpack.c.b16 %v264, %v264
          %vm268 = vcmask 162816
          %v270 = vsel %vm268, %v255, 0
          %vm272 = vcmask 1041408
          %v274 = vsel %vm272, %v266, 0
          %276 = vmatprep.subr.bf16.mxu0 0
          %277 = vmatpush1.bf16.msra.mxu0 %v265
          %278 = vmatprep.subr.bf16.mxu0 0
          %279 = vmatpush1.bf16.msra.mxu0 %v274
          %280 = vmatprep.subr.bf16.mxu0 0
          %281 = vmatpush1.bf16.msra.mxu0 0
          %282 = vmatprep.subr.bf16.mxu0 0
          %283 = vmatpush1.bf16.msra.mxu0 0
          %284 = vmatprep.subr.bf16.mxu0 0
          %285 = vmatpush1.bf16.msra.mxu0 0
          %286 = vmatprep.subr.bf16.mxu0 0
          %287 = vmatpush1.bf16.msra.mxu0 0
          %288 = vmatprep.subr.bf16.mxu0 0
          %289 = vmatpush1.bf16.msra.mxu0 0
          %290 = vmatprep.subr.bf16.mxu0 0
          %291 = vmatpush1.bf16.msra.mxu0 0
          %292 = vmatprep.subr.bf16.mxu0 0
          %293 = vmatpush1.bf16.msra.mxu0 0
          %294 = vmatprep.subr.bf16.mxu0 0
          %295 = vmatpush1.bf16.msra.mxu0 0
          %296 = vmatprep.subr.bf16.mxu0 0
          %297 = vmatpush1.bf16.msra.mxu0 0
          %298 = vmatprep.subr.bf16.mxu0 0
          %299 = vmatpush1.bf16.msra.mxu0 0
          %300 = vmatprep.subr.bf16.mxu0 0
          %301 = vmatpush1.bf16.msra.mxu0 0
          %302 = vmatprep.subr.bf16.mxu0 0
          %303 = vmatpush1.bf16.msra.mxu0 0
          %304 = vmatprep.subr.bf16.mxu0 0
          %305 = vmatpush1.bf16.msra.mxu0 0
          %306 = vmatprep.subr.bf16.mxu0 0
          %307 = vmatpush1.bf16.msra.mxu0 0
          %308 = vmatprep.mubr.bf16.mxu0 0
          %309 = vmatmul.mubr.bf16.gmra.mrb[0].mxu0 %v270
          %v310 = vpop.f32.mrb[0].mxu0
          %v311 = vadd.f32 0.0, %v310
          %v312 = vpop.f32.mrb[0].mxu0
          %v313 = vpop.f32.mrb[0].mxu0
          %v314 = vpop.f32.mrb[0].mxu0
          %315 = vdwg.mxu0
          %p316 = scmp.eq.s32.totalorder %s25, 0
          // Predicated region
          $region45: #{tpu_custom_call.1} parent=43 // pred_check
            %p317 = pneg %p316
          $region46: #{tpu_custom_call.1} parent=43 // pred_check_branch
            %319 = sbr.rel (%p317) target = $region48
          $region47: #{tpu_custom_call.1} parent=43 // pred_region
            %vm320 = vcmask 7168
            %321 = vst.msk [vmem:[#allocation2] sm:$0xff] %vm320, 0.0
            %322 = vst.msk [vmem:[#allocation3] sm:$0xff] %vm320, 0.0
            %323 = vst [vmem:[%s240] sm:$0xff] 0.0
          $region48: #{tpu_custom_call.1} parent=43 // pred_fallthru
            _
          %v324 = vld [vmem:[#allocation2] sm:$0xff]
          %325 = vadd.xlane.f32.xlu0 %v311
          %v326 = vpop.xlane.xlu0 %325
          %v327 = vadd.f32 %v324, %v326
          %vm328 = vcmask 7168
          %329 = vst.msk [vmem:[#allocation2] sm:$0xff] %vm328, %v327
          %v330 = vld [vmem:[#allocation3] sm:$0xff]
          %v331 = vmul.f32 %v311, %v311
          %332 = vadd.xlane.f32.xlu0 %v331
          %v333 = vpop.xlane.xlu0 %332
          %v334 = vadd.f32 %v330, %v333
          %335 = vst.msk [vmem:[#allocation3] sm:$0xff] %vm328, %v334
          %s336 = smul.u32 %s25, 128
          %s337 = sshra.s32 %s336, 7
          %s338 = sand.u32 %s336, 127
          %s339 = scalar_lea.vmem [#allocation6], %s337
          %340 = vst [vmem:[%s339] sm:$0xff] %v311
        $region44: #{tpu_custom_call.1} parent=39 // pred_fallthru
          _
        %p341 = scmp.eq.s32.totalorder %s24, 1
        // Predicated region
        $region49: #{tpu_custom_call.1} parent=39 // pred_check
          %p342 = pneg %p341
        $region50: #{tpu_custom_call.1} parent=39 // pred_check_branch
          %344 = sbr.rel (%p342) target = $region52
        $region51: #{tpu_custom_call.1} parent=39 // pred_region
          %p345 = scmp.eq.s32.totalorder %s25, 0
          // Predicated region
          $region53: #{tpu_custom_call.1} parent=51 // pred_check
            %p346 = pneg %p345
          $region54: #{tpu_custom_call.1} parent=51 // pred_check_branch
            %348 = sbr.rel (%p346) target = $region56
          $region55: #{tpu_custom_call.1} parent=51 // pred_region
            %v349 = vld [vmem:[#allocation2] sm:$0xff]
            %v350 = vmul.f32 %v349, 0.03125
            %v351 = vld [vmem:[#allocation3] sm:$0xff]
            %v352 = vmul.f32 %v351, 0.03125
            %v353 = vmul.f32 %v350, %v350
            %v354 = vsub.f32 %v352, %v353
            %v355 = vmax.f32 %v354, 0.0
            %v356 = vadd.f32 %v355, 1e-05
            %v357 = vrsqrt.pop %v356
            %v358 = vld [vmem:[%s3] sm:$0xff]
            %v359 = vmul.f32 %v358, %v357
            %vm360 = vcmask 7168
            %361 = vst.msk [vmem:[#allocation4] sm:$0xff] %vm360, %v359
            %v362 = vld [vmem:[%s4] sm:$0xff]
            %v363 = vmul.f32 %v350, %v359
            %v364 = vsub.f32 %v362, %v363
            %365 = vst.msk [vmem:[#allocation5] sm:$0xff] %vm360, %v364
          $region56: #{tpu_custom_call.1} parent=51 // pred_fallthru
            _
          %s366 = smul.u32 %s25, 128
          %s367 = sshra.s32 %s366, 7
          %s368 = sand.u32 %s366, 127
          %s369 = scalar_lea.vmem [#allocation6], %s367
          %v370 = vld [vmem:[%s369] sm:$0xff]
          %v371 = vld [vmem:[#allocation4] sm:$0xff]
          %373 = vset.pattern.permute.xlu0 0
          %374 = vperm.xlu0 %373, %v371
          %v375 = vpop.permute.xlu0 %374
          %v377 = vmul.f32 %v370, %v375
          %v378 = vld [vmem:[#allocation5] sm:$0xff]
          %380 = vset.pattern.permute.xlu0 0
          %381 = vperm.xlu0 %380, %v378
          %v382 = vpop.permute.xlu0 %381
          %v384 = vadd.f32 %v377, %v382
          %v385 = vmax.f32 %v384, 0.0
          %386 = vst [vmem:[%s240] sm:$0xff] %v385
        $region52: #{tpu_custom_call.1} parent=39 // pred_fallthru
          _
        %s387 = sand.u32 %s156, 1
        %s388 = scalar_lea.sflag [#allocation9], %s387
        %s389 = sand.u32 %s156, 1
        %s390 = smul.addr %s389, 8
        %s391 = scalar_lea.vmem [#allocation8], %s390
        // Predicated region
        $region57: #{tpu_custom_call.1} parent=39 // pred_check
          %p392 = pneg %p166
        $region58: #{tpu_custom_call.1} parent=39 // pred_check_branch
          %394 = sbr.rel (%p392) target = $region60
        $region59: #{tpu_custom_call.1} parent=39 // pred_region
          %s395 = smul.u32 %s25, %s24
          %s397 = ssub.s32 128, 128
          %398 = vsyncadd %s388, %s397
          %s399 = smul.addr %s395, 128
          %s400 = scalar_lea.hbm %s5, %s399
          %s402 = sshll.u32 %s391, 4
          %s403 = int_to_ptr.vmem [resolvable:$true] %s402
          %405 = dma.vmem_to_hbm [thread:$0]  %s403, 128, %s400, %s388
        $region60: #{tpu_custom_call.1} parent=39 // pred_fallthru
          _
      $region40: #{tpu_custom_call.1} parent=5 // pred_fallthru
        _
      %p406 = scmp.le.s32.totalorder 2, %s15
      // Predicated region
      $region61: #{tpu_custom_call.1} parent=5 // pred_check
        %p407 = pneg %p406
      $region62: #{tpu_custom_call.1} parent=5 // pred_check_branch
        %409 = sbr.rel (%p407) target = $region64
      $region63: #{tpu_custom_call.1} parent=5 // pred_region
        %s410 = ssub.s32 %s15, 2
        // Predicated region
        $region65: #{tpu_custom_call.1} parent=63 // pred_check
          %p411 = pneg %p172
        $region66: #{tpu_custom_call.1} parent=63 // pred_check_branch
          %413 = sbr.rel (%p411) target = $region68
        $region67: #{tpu_custom_call.1} parent=63 // pred_region
          %s414 = sand.u32 %s157, 1
          %s415 = scalar_lea.sflag [#allocation9], %s414
          %s416 = sand.u32 %s157, 1
          %s417 = smul.addr %s416, 8
          %s418 = scalar_lea.vmem [#allocation8], %s417
          %419 = dma.done %s415, 128
        $region68: #{tpu_custom_call.1} parent=63 // pred_fallthru
          _
      $region64: #{tpu_custom_call.1} parent=5 // pred_fallthru
        _
    $region6: #{tpu_custom_call.1} parent=1 // loop_footer
      %s19 = sadd.s32 1, %s15
    $region7: #{tpu_custom_call.1} parent=1 // loop_footer_branch
      %14 = sbr.rel target = $region3
    $region8: #{tpu_custom_call.1} parent=1 // loop_exit
      _
    %420 = vsyncpa [#allocation9], 1
    %s421 = scalar_lea.sflag [#allocation9], 1
    %422 = vsyncpa %s421, 1

</llo_original>
